<compile_context>
chip_gen: v7x
topology: tpu7x:2x2x1
jax: 0.10.0
libtpu: 0.0.40
codegen_flags: <defaults>
</compile_context>

<pallas_src>
import functools
import math

import jax
import jax.numpy as jnp
from jax.experimental import pallas as pl
from jax.experimental.pallas import tpu as pltpu


_NEG_MASK = -1e9  # padded u rows: exp(leaky(-1e9) - m) underflows to exactly 0


def _round_up(x, m):
    return ((x + m - 1) // m) * m


def _choose_tiling(n):
    """Pad N to a 128 multiple; pick the largest square tile (<=512) whose
    extra padding stays within ~12.5% of the minimal 128-padding."""
    base = _round_up(n, 128)
    for t in (512, 256, 128):
        n_pad = _round_up(n, t)
        if n_pad - base <= base // 8:
            return n_pad, t
    return base, 128


def _pick_vmem_limit():
    """~7/8 of physical VMEM: ~56 MiB on v7x (64 MiB/TC), capped at 112 MiB
    on v5e/v6e (128 MiB) — leaves headroom for Mosaic internal scratch."""
    cap = 128 * 1024 * 1024
    try:
        cap = int(getattr(pltpu.get_tpu_info(), "vmem_capacity_bytes", cap) or cap)
    except Exception:
        pass
    return min(cap * 7 // 8, 112 * 1024 * 1024)


def _stats_kernel(cols_ref, rows_ref, stats_ref, *, leaky_slope):
    """Pass 1: per-column (v) online-softmax stats, reducing over u tiles.

    Grid (nv, nu), dimension_semantics=("parallel", "arbitrary").
      cols_ref : (tu, 8) f32  [a_u, A_u, B_u, 1, 0...]      (u tile)
      rows_ref : (8, tv) f32  [1, cos, sin, b_v, 0...]       (v tile)
      stats_ref: (2, tv) f32  row 0 = running max, row 1 = running sum
                 (resident accumulator across the u axis)
    """
    iu = pl.program_id(1)

    # logits[u,v] = a_u + b_v + A_u*cos(phi_v) + B_u*sin(phi_v)  (K=8 MXU matmul)
    logits = jnp.dot(cols_ref[...], rows_ref[...],
                     preferred_element_type=jnp.float32)          # (tu, tv)
    e = jnp.maximum(logits, leaky_slope * logits)                  # LeakyReLU
    cmax = jnp.max(e, axis=0, keepdims=True)                       # (1, tv)

    @pl.when(iu == 0)
    def _():
        stats_ref[0:1, :] = jnp.full_like(cmax, -1e30)
        stats_ref[1:2, :] = jnp.zeros_like(cmax)

    m_old = stats_ref[0:1, :]
    s_old = stats_ref[1:2, :]
    m_new = jnp.maximum(m_old, cmax)
    s_new = (s_old * jnp.exp(m_old - m_new)
             + jnp.sum(jnp.exp(e - m_new), axis=0, keepdims=True))
    stats_ref[0:1, :] = m_new
    stats_ref[1:2, :] = s_new


def _apply_kernel(cols_ref, rows_ref, m_ref, xall_ref, out_ref, *, leaky_slope):
    """Pass 2: out[u_tile] += exp(e - m_v) @ (Xall * 1/s_v), all heads fused.

    Grid (nu, nv), dimension_semantics=("parallel", "arbitrary"); out_ref is
    the resident accumulator across the v axis (no scratch, no epilogue).
      m_ref   : (1, tv)  f32   per-column max
      xall_ref: (tv, HCp) bf16  rows of X@Wall, pre-scaled by 1/s_v
      out_ref : (tu, HCp) f32
    """
    jv = pl.program_id(1)

    @pl.when(jv == 0)
    def _():
        out_ref[...] = jnp.zeros_like(out_ref)

    logits = jnp.dot(cols_ref[...], rows_ref[...],
                     preferred_element_type=jnp.float32)           # (tu, tv)
    e = jnp.maximum(logits, leaky_slope * logits)
    p = jnp.exp(e - m_ref[...])                                    # unnormalized
    out_ref[...] += jnp.dot(p.astype(jnp.bfloat16), xall_ref[...],
                            preferred_element_type=jnp.float32)


def local_topology_block_with_angle(X, phis, w_gamma, w_heads, leaky_slope=0.2):
    """X: (N, C) f32, phis: (N,) f32, w_gamma: (2C+2,) f32,
    w_heads: (H, C, C) f32 (applied as X @ w_heads[k], i.e. torch weight^T)."""
    N, C = X.shape
    H = w_heads.shape[0]
    assert w_gamma.shape == (2 * C + 2,)
    # max(x, slope*x) LeakyReLU is only valid for slopes in [0, 1].
    assert 0.0 <= leaky_slope <= 1.0

    f32 = jnp.float32
    X = X.astype(f32)
    phis = phis.astype(f32)
    w_gamma = w_gamma.astype(f32)
    w_heads = w_heads.astype(f32)

    w1, w2 = w_gamma[:C], w_gamma[C:2 * C]
    wc, ws = w_gamma[2 * C], w_gamma[2 * C + 1]

    HC = H * C
    HCp = _round_up(HC, 128)           # lane-dense MXU output / accumulator
    Np, tile = _choose_tiling(N)       # padded N; tu == tv == tile
    tu = tv = tile
    nu, nv = Np // tu, Np // tv

    valid = jnp.arange(Np) < N
    Xp = jnp.zeros((Np, C), f32).at[:N].set(X)
    php = jnp.zeros((Np,), f32).at[:N].set(phis)

    # O(N*C) precompute hoisted out of the O(N^2) kernels. Angle identity:
    #   wc*cos(pu-pv) + ws*sin(pu-pv) = A_u*cos(pv) + B_u*sin(pv)
    a = Xp @ w1
    b = Xp @ w2
    cosp, sinp = jnp.cos(php), jnp.sin(php)
    A = wc * cosp + ws * sinp
    B = wc * sinp - ws * cosp

    a = jnp.where(valid, a, f32(_NEG_MASK))   # mask padded u rows out of every
    A = jnp.where(valid, A, 0.0)              # column softmax denominator
    B = jnp.where(valid, B, 0.0)
    cos_m = jnp.where(valid, cosp, 0.0)
    sin_m = jnp.where(valid, sinp, 0.0)
    one = jnp.ones((Np,), f32)
    zero = jnp.zeros((Np,), f32)

    # K=8 packing (rank-4 padded to 8 sublanes): logits = cols @ rows on MXU.
    cols = jnp.stack([a, A, B, one, zero, zero, zero, zero], axis=1)          # (Np, 8)
    rows = jnp.stack([one, cos_m, sin_m, b, zero, zero, zero, zero], axis=0)  # (8, Np)

    # All head weights fused into one lane-dense (C, HCp) matrix; padded v
    # rows of Xall are zero so they contribute nothing to the output.
    Wall = jnp.transpose(w_heads, (1, 0, 2)).reshape(C, HC)
    Wall = jnp.zeros((C, HCp), f32).at[:, :HC].set(Wall)
    Xall = Xp @ Wall                                                          # (Np, HCp) f32

    vmem_limit = _pick_vmem_limit()

    # ---------------- pass 1: per-column softmax stats (max, sum over u) ----
    stats = pl.pallas_call(
        functools.partial(_stats_kernel, leaky_slope=leaky_slope),
        out_shape=jax.ShapeDtypeStruct((2, Np), f32),
        grid=(nv, nu),
        in_specs=[
            pl.BlockSpec((tu, 8), lambda jv, iu: (iu, 0)),
            pl.BlockSpec((8, tv), lambda jv, iu: (0, jv)),
        ],
        out_specs=pl.BlockSpec((2, tv), lambda jv, iu: (0, jv)),
        compiler_params=pltpu.CompilerParams(
            dimension_semantics=("parallel", "arbitrary"),
            vmem_limit_bytes=vmem_limit),
        cost_estimate=pl.CostEstimate(
            flops=Np * Np * (2 * 8 + 8),
            transcendentals=Np * Np,
            bytes_accessed=(nv + 1) * Np * 8 * 4 + 2 * Np * 4),
    )(cols, rows)

    # Fold 1/sum into the small Xall operand (diag(1/s) commutes into the
    # matmul): O(N*HC) wrapper work instead of an O(N^2) in-kernel multiply.
    # Scale in f32, then cast the MXU operand to bf16.
    m_row = stats[0:1, :]                      # (1, Np)
    inv_s = 1.0 / stats[1, :]                  # (Np,), exact f32 reciprocal
    Xall_scaled = (Xall * inv_s[:, None]).astype(jnp.bfloat16)

    # ---------------- pass 2: attention apply, all heads fused --------------
    acc = pl.pallas_call(
        functools.partial(_apply_kernel, leaky_slope=leaky_slope),
        out_shape=jax.ShapeDtypeStruct((Np, HCp), f32),
        grid=(nu, nv),
        in_specs=[
            pl.BlockSpec((tu, 8), lambda iu, jv: (iu, 0)),
            pl.BlockSpec((8, tv), lambda iu, jv: (0, jv)),
            pl.BlockSpec((1, tv), lambda iu, jv: (0, jv)),
            pl.BlockSpec((tv, HCp), lambda iu, jv: (jv, 0)),
        ],
        out_specs=pl.BlockSpec((tu, HCp), lambda iu, jv: (iu, 0)),
        compiler_params=pltpu.CompilerParams(
            dimension_semantics=("parallel", "arbitrary"),
            vmem_limit_bytes=vmem_limit),
        cost_estimate=pl.CostEstimate(
            flops=Np * Np * (2 * 8 + 2 * HCp + 4),
            transcendentals=Np * Np,
            bytes_accessed=(nu * Np * (8 * 4 + 4 + HCp * 2)
                            + Np * (8 * 4 + HCp * 4))),
    )(cols, rows, m_row, Xall_scaled)

    # Per-head ReLU + head-sum in XLA (O(N*HC), negligible) — keeps the kernel
    # output lane-dense and removes the in-kernel 32-lane slicing epilogue.
    y = acc[:N, :HC].reshape(N, H, C)
    return jnp.sum(jnp.maximum(y, 0.0), axis=1)
    # TODO(synk): a batch-of-graphs axis would add another "parallel" grid dim;
    # this module's forward is a single graph.


def _ref_forward(X, phis, w_gamma, w_heads, leaky_slope=0.2):
    """Pure-JAX reference mirroring the PyTorch forward exactly."""
    N, C = X.shape
    Xu = jnp.broadcast_to(X[:, None, :], (N, N, C))
    Xv = jnp.broadcast_to(X[None, :, :], (N, N, C))
    delta = phis[:, None] - phis[None, :]
    pairs = jnp.concatenate(
        [Xu, Xv, jnp.cos(delta)[..., None], jnp.sin(delta)[..., None]], axis=-1)
    e = pairs @ w_gamma                                   # Linear(2C+2 -> 1)
    e = jnp.where(e > 0, e, leaky_slope * e)              # LeakyReLU
    Aatt = jax.nn.softmax(e, axis=0)                      # softmax over dim=0
    out = jnp.zeros((N, C), jnp.float32)
    for k in range(w_heads.shape[0]):
        out = out + jnp.maximum(Aatt @ (X @ w_heads[k]), 0.0)
    return out


if __name__ == "__main__":
    N, C, H = 16, 32, 3
    key = jax.random.PRNGKey(0)
    k1, k2, k3, k4 = jax.random.split(key, 4)

    X = jax.random.normal(k1, (N, C), dtype=jnp.float32)
    phis = jax.random.uniform(k2, (N,), dtype=jnp.float32,
                              minval=0.0, maxval=2.0 * math.pi)
    # Synthetic parameters (shapes from the module __init__):
    #   W_gamma: Linear(2C+2 -> 1, bias=False)  -> vector of length 2C+2
    #   W_heads: H x Linear(C -> C, bias=False) -> (H, C, C), applied as X @ W
    w_gamma = 0.1 * jax.random.normal(k3, (2 * C + 2,), dtype=jnp.float32)
    w_heads = 0.1 * jax.random.normal(k4, (H, C, C), dtype=jnp.float32)

    out = jax.jit(local_topology_block_with_angle)(X, phis, w_gamma, w_heads)
    out = jax.block_until_ready(out)

    ref = _ref_forward(X, phis, w_gamma, w_heads)
    assert out.shape == (N, C) and out.dtype == jnp.float32
    err = float(jnp.max(jnp.abs(out - ref)))
    assert jnp.allclose(out, ref, atol=2e-2, rtol=2e-2), f"max abs err {err}"
    print("KERNEL_OK")
</pallas_src>

<mosaic_0001>
module attributes {stable_mosaic.version = 11 : i64} {
  func.func @_apply_kernel(%arg0: i32, %arg1: i32, %arg2: memref<128x8xf32, #tpu.memory_space<vmem>>, %arg3: memref<8x128xf32, #tpu.memory_space<vmem>>, %arg4: memref<1x128xf32, #tpu.memory_space<vmem>>, %arg5: memref<128x128xbf16, #tpu.memory_space<vmem>>, %arg6: memref<128x128xf32, #tpu.memory_space<vmem>>) attributes {dimension_semantics = [#tpu.dimension_semantics<parallel>, #tpu.dimension_semantics<arbitrary>], iteration_bounds = array<i64: 1, 1>, scalar_prefetch = 0 : i64, scratch_operands = 0 : i64, tpu.core_type = #tpu.core_type<tc>, window_params = [{transform_indices = @transform_0, window_bounds = array<i64: 128, 8>}, {transform_indices = @transform_1, window_bounds = array<i64: 8, 128>}, {transform_indices = @transform_2, window_bounds = array<i64: 1, 128>}, {transform_indices = @transform_3, window_bounds = array<i64: 128, 128>}, {transform_indices = @transform_4, window_bounds = array<i64: 128, 128>}]} {
    %c0_i32 = arith.constant 0 : i32
    %0 = arith.cmpi eq, %arg1, %c0_i32 : i32
    %1 = arith.extui %0 : i1 to i32
    %c0_i32_0 = arith.constant 0 : i32
    %2 = arith.cmpi ne, %1, %c0_i32_0 : i32
    scf.if %2 {
      %cst_14 = arith.constant 0.000000e+00 : f32
      %19 = vector.broadcast %cst_14 : f32 to vector<128x128xf32>
      %c0_15 = arith.constant 0 : index
      %c0_16 = arith.constant 0 : index
      %20 = vector.load %arg6[%c0_15, %c0_16] : memref<128x128xf32, #tpu.memory_space<vmem>>, vector<128x128xf32>
      tpu.vector_store %arg6[%c0_15, %c0_16], %19 {strides = array<i32>} : memref<128x128xf32, #tpu.memory_space<vmem>>, vector<128x128xf32>,
    } else {
    }
    %c0 = arith.constant 0 : index
    %c0_1 = arith.constant 0 : index
    %3 = vector.load %arg2[%c0, %c0_1] : memref<128x8xf32, #tpu.memory_space<vmem>>, vector<128x8xf32>
    %c0_2 = arith.constant 0 : index
    %c0_3 = arith.constant 0 : index
    %4 = vector.load %arg3[%c0_2, %c0_3] : memref<8x128xf32, #tpu.memory_space<vmem>>, vector<8x128xf32>
    %cst = arith.constant dense<0.000000e+00> : vector<128x128xf32>
    %5 = tpu.matmul %3, %4, %cst {dimension_numbers = #tpu.dot_dimension_numbers<[1], [0], [0], [1], [0, 0, 1, 1], [], []>} : vector<128x8xf32>, vector<8x128xf32>, vector<128x128xf32> -> vector<128x128xf32>
    %cst_4 = arith.constant 2.000000e-01 : f32
    %6 = vector.broadcast %cst_4 : f32 to vector<128x128xf32>
    %7 = arith.mulf %6, %5 : vector<128x128xf32>
    %8 = arith.maximumf %5, %7 : vector<128x128xf32>
    %c0_5 = arith.constant 0 : index
    %c0_6 = arith.constant 0 : index
    %9 = vector.load %arg4[%c0_5, %c0_6] : memref<1x128xf32, #tpu.memory_space<vmem>>, vector<1x128xf32>
    %10 = vector.broadcast %9 : vector<1x128xf32> to vector<128x128xf32>
    %11 = arith.subf %8, %10 : vector<128x128xf32>
    %12 = math.exp %11 : vector<128x128xf32>
    %c0_7 = arith.constant 0 : index
    %c0_8 = arith.constant 0 : index
    %13 = vector.load %arg6[%c0_7, %c0_8] : memref<128x128xf32, #tpu.memory_space<vmem>>, vector<128x128xf32>
    %14 = arith.truncf %12 : vector<128x128xf32> to vector<128x128xbf16>
    %c0_9 = arith.constant 0 : index
    %c0_10 = arith.constant 0 : index
    %15 = vector.load %arg5[%c0_9, %c0_10] : memref<128x128xbf16, #tpu.memory_space<vmem>>, vector<128x128xbf16>
    %cst_11 = arith.constant dense<0.000000e+00> : vector<128x128xf32>
    %16 = tpu.matmul %14, %15, %cst_11 {dimension_numbers = #tpu.dot_dimension_numbers<[1], [0], [0], [1], [0, 0, 1, 1], [], []>} : vector<128x128xbf16>, vector<128x128xbf16>, vector<128x128xf32> -> vector<128x128xf32>
    %17 = arith.addf %13, %16 : vector<128x128xf32>
    %c0_12 = arith.constant 0 : index
    %c0_13 = arith.constant 0 : index
    %18 = vector.load %arg6[%c0_12, %c0_13] : memref<128x128xf32, #tpu.memory_space<vmem>>, vector<128x128xf32>
    tpu.vector_store %arg6[%c0_12, %c0_13], %17 {strides = array<i32>} : memref<128x128xf32, #tpu.memory_space<vmem>>, vector<128x128xf32>,
    return
  }
  func.func @transform_0(%arg0: i32, %arg1: i32) -> (i32, i32) {
    %c0_i32 = arith.constant 0 : i32
    %c0_i32_0 = arith.constant 0 : i32
    return %arg0, %c0_i32 : i32, i32
  }
  func.func @transform_1(%arg0: i32, %arg1: i32) -> (i32, i32) {
    %c0_i32 = arith.constant 0 : i32
    %c0_i32_0 = arith.constant 0 : i32
    return %c0_i32, %arg1 : i32, i32
  }
  func.func @transform_2(%arg0: i32, %arg1: i32) -> (i32, i32) {
    %c0_i32 = arith.constant 0 : i32
    %c0_i32_0 = arith.constant 0 : i32
    return %c0_i32, %arg1 : i32, i32
  }
  func.func @transform_3(%arg0: i32, %arg1: i32) -> (i32, i32) {
    %c0_i32 = arith.constant 0 : i32
    %c0_i32_0 = arith.constant 0 : i32
    return %arg1, %c0_i32 : i32, i32
  }
  func.func @transform_4(%arg0: i32, %arg1: i32) -> (i32, i32) {
    %c0_i32 = arith.constant 0 : i32
    %c0_i32_0 = arith.constant 0 : i32
    return %arg0, %c0_i32 : i32, i32
  }
}

module attributes {stable_mosaic.version = 11 : i64} {
  func.func @_stats_kernel(%arg0: i32, %arg1: i32, %arg2: memref<128x8xf32, #tpu.memory_space<vmem>>, %arg3: memref<8x128xf32, #tpu.memory_space<vmem>>, %arg4: memref<2x128xf32, #tpu.memory_space<vmem>>) attributes {dimension_semantics = [#tpu.dimension_semantics<parallel>, #tpu.dimension_semantics<arbitrary>], iteration_bounds = array<i64: 1, 1>, scalar_prefetch = 0 : i64, scratch_operands = 0 : i64, tpu.core_type = #tpu.core_type<tc>, window_params = [{transform_indices = @transform_0, window_bounds = array<i64: 128, 8>}, {transform_indices = @transform_1, window_bounds = array<i64: 8, 128>}, {transform_indices = @transform_2, window_bounds = array<i64: 2, 128>}]} {
    %c0 = arith.constant 0 : index
    %c0_0 = arith.constant 0 : index
    %0 = vector.load %arg2[%c0, %c0_0] : memref<128x8xf32, #tpu.memory_space<vmem>>, vector<128x8xf32>
    %c0_1 = arith.constant 0 : index
    %c0_2 = arith.constant 0 : index
    %1 = vector.load %arg3[%c0_1, %c0_2] : memref<8x128xf32, #tpu.memory_space<vmem>>, vector<8x128xf32>
    %cst = arith.constant dense<0.000000e+00> : vector<128x128xf32>
    %2 = tpu.matmul %0, %1, %cst {dimension_numbers = #tpu.dot_dimension_numbers<[1], [0], [0], [1], [0, 0, 1, 1], [], []>} : vector<128x8xf32>, vector<8x128xf32>, vector<128x128xf32> -> vector<128x128xf32>
    %cst_3 = arith.constant 2.000000e-01 : f32
    %3 = vector.broadcast %cst_3 : f32 to vector<128x128xf32>
    %4 = arith.mulf %3, %2 : vector<128x128xf32>
    %5 = arith.maximumf %2, %4 : vector<128x128xf32>
    %cst_4 = arith.constant dense<0xFF800000> : vector<128xf32>
    %6 = vector.multi_reduction <maximumf>, %5, %cst_4 [0] : vector<128x128xf32> to vector<128xf32>
    %7 = vector.shape_cast %6 : vector<128xf32> to vector<1x128xf32>
    %c0_i32 = arith.constant 0 : i32
    %8 = arith.cmpi eq, %arg1, %c0_i32 : i32
    %9 = arith.extui %8 : i1 to i32
    %c0_i32_5 = arith.constant 0 : i32
    %10 = arith.cmpi ne, %9, %c0_i32_5 : i32
    scf.if %10 {
      %cst_14 = arith.constant -1.000000e+30 : f32
      %25 = vector.broadcast %cst_14 : f32 to vector<1x128xf32>
      %c0_15 = arith.constant 0 : index
      %c0_16 = arith.constant 0 : index
      %26 = vector.load %arg4[%c0_15, %c0_16] : memref<2x128xf32, #tpu.memory_space<vmem>>, vector<1x128xf32>
      tpu.vector_store %arg4[%c0_15, %c0_16], %25 {strides = array<i32>} : memref<2x128xf32, #tpu.memory_space<vmem>>, vector<1x128xf32>,
      %cst_17 = arith.constant 0.000000e+00 : f32
      %27 = vector.broadcast %cst_17 : f32 to vector<1x128xf32>
      %c1_18 = arith.constant 1 : index
      %c0_19 = arith.constant 0 : index
      %28 = vector.load %arg4[%c1_18, %c0_19] : memref<2x128xf32, #tpu.memory_space<vmem>>, vector<1x128xf32>
      tpu.vector_store %arg4[%c1_18, %c0_19], %27 {strides = array<i32>} : memref<2x128xf32, #tpu.memory_space<vmem>>, vector<1x128xf32>,
    } else {
    }
    %c0_6 = arith.constant 0 : index
    %c0_7 = arith.constant 0 : index
    %11 = vector.load %arg4[%c0_6, %c0_7] : memref<2x128xf32, #tpu.memory_space<vmem>>, vector<1x128xf32>
    %c1 = arith.constant 1 : index
    %c0_8 = arith.constant 0 : index
    %12 = vector.load %arg4[%c1, %c0_8] : memref<2x128xf32, #tpu.memory_space<vmem>>, vector<1x128xf32>
    %13 = arith.maximumf %11, %7 : vector<1x128xf32>
    %14 = arith.subf %11, %13 : vector<1x128xf32>
    %15 = math.exp %14 : vector<1x128xf32>
    %16 = arith.mulf %12, %15 : vector<1x128xf32>
    %17 = vector.broadcast %13 : vector<1x128xf32> to vector<128x128xf32>
    %18 = arith.subf %5, %17 : vector<128x128xf32>
    %19 = math.exp %18 : vector<128x128xf32>
    %cst_9 = arith.constant dense<0.000000e+00> : vector<128xf32>
    %20 = vector.multi_reduction <add>, %19, %cst_9 [0] : vector<128x128xf32> to vector<128xf32>
    %21 = vector.shape_cast %20 : vector<128xf32> to vector<1x128xf32>
    %22 = arith.addf %16, %21 : vector<1x128xf32>
    %c0_10 = arith.constant 0 : index
    %c0_11 = arith.constant 0 : index
    %23 = vector.load %arg4[%c0_10, %c0_11] : memref<2x128xf32, #tpu.memory_space<vmem>>, vector<1x128xf32>
    tpu.vector_store %arg4[%c0_10, %c0_11], %13 {strides = array<i32>} : memref<2x128xf32, #tpu.memory_space<vmem>>, vector<1x128xf32>,
    %c1_12 = arith.constant 1 : index
    %c0_13 = arith.constant 0 : index
    %24 = vector.load %arg4[%c1_12, %c0_13] : memref<2x128xf32, #tpu.memory_space<vmem>>, vector<1x128xf32>
    tpu.vector_store %arg4[%c1_12, %c0_13], %22 {strides = array<i32>} : memref<2x128xf32, #tpu.memory_space<vmem>>, vector<1x128xf32>,
    return
  }
  func.func @transform_0(%arg0: i32, %arg1: i32) -> (i32, i32) {
    %c0_i32 = arith.constant 0 : i32
    %c0_i32_0 = arith.constant 0 : i32
    return %arg1, %c0_i32 : i32, i32
  }
  func.func @transform_1(%arg0: i32, %arg1: i32) -> (i32, i32) {
    %c0_i32 = arith.constant 0 : i32
    %c0_i32_0 = arith.constant 0 : i32
    return %c0_i32, %arg0 : i32, i32
  }
  func.func @transform_2(%arg0: i32, %arg1: i32) -> (i32, i32) {
    %c0_i32 = arith.constant 0 : i32
    %c0_i32_0 = arith.constant 0 : i32
    return %c0_i32, %arg0 : i32, i32
  }
}

</mosaic_0001>

<llo_original>
// kernel: local_topology_block_with_angle.3
$region0: #{local_topology_block_with_angle.3}
  #allocation0 [shape = 'u32[]', space=smem, size = 0x4, offset = 0x4, fixed_abs, tag = 'smem constant byte address 0x4 - core index']
  #allocation1 [shape = 'u32[144,128]{1,0:T(1,128)}', space=vmem, size = 0x12000, scoped, tag = 'internal scratch']
  %s0 = inlined_call_operand.hbm [shape: f32[128,8], index: 0, kind: input, shape index: {}]
  %s1 = inlined_call_operand.hbm [shape: f32[8,128], index: 1, kind: input, shape index: {}]
  %s2 = inlined_call_operand.hbm [shape: f32[1,128], index: 2, kind: input, shape index: {}]
  %s3 = inlined_call_operand.hbm [shape: bf16[128,128], index: 3, kind: input, shape index: {}]
  %s4 = inlined_call_operand.hbm [shape: f32[128,128], index: 4, kind: output, shape index: {}]
  %s5 = sld [smem:[#allocation0]]
  $region46: #{local_topology_block_with_angle.3} parent=0
    _
  %s7 = ssub.s32 1, %s5
  %s8 = scalar_select 0, %s7, %s5
  $region1: #{local_topology_block_with_angle.3} parent=0
    #allocation2 [shape = 'u8[65536]{0}', space=vmem, size = 0x10000, scoped, tag = 'input window, operand 0, single buffered']
    #allocation3 [shape = 's32[1]{0}', space=sflag, size = 0x4, scoped, tag = 'scoped memory for local_topology_block_with_angle.3']
    #allocation4 [shape = 's32[1]{0}', space=sflag, size = 0x4, scoped, tag = 'scoped memory for local_topology_block_with_angle.3']
    #allocation5 [shape = 'u8[4096]{0}', space=vmem, size = 0x1000, scoped, tag = 'input window, operand 1, single buffered']
    #allocation6 [shape = 's32[1]{0}', space=sflag, size = 0x4, scoped, tag = 'scoped memory for local_topology_block_with_angle.3']
    #allocation7 [shape = 'u8[512]{0}', space=vmem, size = 0x400, scoped, tag = 'input window, operand 2, single buffered']
    #allocation8 [shape = 'u8[32768]{0}', space=vmem, size = 0x8000, scoped, tag = 'input window, operand 3, single buffered']
    #allocation9 [shape = 's32[1]{0}', space=sflag, size = 0x4, scoped, tag = 'scoped memory for local_topology_block_with_angle.3']
    #allocation10 [shape = 'u8[65536]{0}', space=vmem, size = 0x10000, scoped, tag = 'output window, operand 0, single buffered']
    %9 = vsyncpa [#allocation3], 0
    %10 = vsyncpa [#allocation6], 0
    %11 = vsyncpa [#allocation9], 0
    %12 = vsyncpa [#allocation4], 0
    // Predicated region
    $region2: #{local_topology_block_with_angle.3} parent=1 // pred_check
      _
    $region3: #{local_topology_block_with_angle.3} parent=1 // pred_check_branch
      %14 = sbr.rel (0) target = $region5
    $region4: #{local_topology_block_with_angle.3} parent=1 // pred_region
      %s16 = ssub.s32 2048, 2048
      %17 = vsyncadd [#allocation3], %s16
      %s18 = sshll.u32 [#allocation2], 4
      %s19 = int_to_ptr.vmem [resolvable:$true] %s18
      %24 = dma.hbm_to_vmem [thread:$0]  %s0, 2048, %s19, [#allocation3], 128, 128, 8
    $region5: #{local_topology_block_with_angle.3} parent=1 // pred_fallthru
      _
    // Predicated region
    $region6: #{local_topology_block_with_angle.3} parent=1 // pred_check
      _
    $region7: #{local_topology_block_with_angle.3} parent=1 // pred_check_branch
      %26 = sbr.rel (0) target = $region9
    $region8: #{local_topology_block_with_angle.3} parent=1 // pred_region
      %s28 = ssub.s32 128, 128
      %29 = vsyncadd [#allocation6], %s28
      %s31 = sshll.u32 [#allocation5], 4
      %s32 = int_to_ptr.vmem [resolvable:$true] %s31
      %34 = dma.hbm_to_vmem [thread:$0]  %s1, 128, %s32, [#allocation6]
    $region9: #{local_topology_block_with_angle.3} parent=1 // pred_fallthru
      _
    // Predicated region
    $region10: #{local_topology_block_with_angle.3} parent=1 // pred_check
      _
    $region11: #{local_topology_block_with_angle.3} parent=1 // pred_check_branch
      %36 = sbr.rel (0) target = $region13
    $region12: #{local_topology_block_with_angle.3} parent=1 // pred_region
      %s38 = ssub.s32 16, 16
      %39 = vsyncadd [#allocation6], %s38
      %s41 = sshll.u32 [#allocation7], 4
      %s42 = int_to_ptr.vmem [resolvable:$true] %s41
      %44 = dma.hbm_to_vmem [thread:$0]  %s2, 16, %s42, [#allocation6]
    $region13: #{local_topology_block_with_angle.3} parent=1 // pred_fallthru
      _
    // Predicated region
    $region14: #{local_topology_block_with_angle.3} parent=1 // pred_check
      _
    $region15: #{local_topology_block_with_angle.3} parent=1 // pred_check_branch
      %46 = sbr.rel (0) target = $region17
    $region16: #{local_topology_block_with_angle.3} parent=1 // pred_region
      %s48 = ssub.s32 1024, 1024
      %49 = vsyncadd [#allocation9], %s48
      %s50 = sshll.u32 [#allocation8], 4
      %s51 = int_to_ptr.vmem [resolvable:$true] %s50
      %56 = dma.hbm_to_vmem [thread:$0]  %s3, 1024, %s51, [#allocation9], 64, 64, 4
    $region17: #{local_topology_block_with_angle.3} parent=1 // pred_fallthru
      _
    // Predicated region
    $region18: #{local_topology_block_with_angle.3} parent=1 // pred_check
      _
    $region19: #{local_topology_block_with_angle.3} parent=1 // pred_check_branch
      %58 = sbr.rel (0) target = $region21
    $region20: #{local_topology_block_with_angle.3} parent=1 // pred_region
      %59 = dma.done [#allocation3], 2048
    $region21: #{local_topology_block_with_angle.3} parent=1 // pred_fallthru
      _
    // Predicated region
    $region22: #{local_topology_block_with_angle.3} parent=1 // pred_check
      _
    $region23: #{local_topology_block_with_angle.3} parent=1 // pred_check_branch
      %61 = sbr.rel (0) target = $region25
    $region24: #{local_topology_block_with_angle.3} parent=1 // pred_region
      %62 = dma.done [#allocation6], 128
    $region25: #{local_topology_block_with_angle.3} parent=1 // pred_fallthru
      _
    // Predicated region
    $region26: #{local_topology_block_with_angle.3} parent=1 // pred_check
      _
    $region27: #{local_topology_block_with_angle.3} parent=1 // pred_check_branch
      %64 = sbr.rel (0) target = $region29
    $region28: #{local_topology_block_with_angle.3} parent=1 // pred_region
      %65 = dma.done [#allocation6], 16
    $region29: #{local_topology_block_with_angle.3} parent=1 // pred_fallthru
      _
    // Predicated region
    $region30: #{local_topology_block_with_angle.3} parent=1 // pred_check
      _
    $region31: #{local_topology_block_with_angle.3} parent=1 // pred_check_branch
      %67 = sbr.rel (0) target = $region33
    $region32: #{local_topology_block_with_angle.3} parent=1 // pred_region
      %68 = dma.done [#allocation9], 1024
    $region33: #{local_topology_block_with_angle.3} parent=1 // pred_fallthru
      _
    %p70 = scmp.eq.s32.totalorder 0, 0
    // Predicated region
    $region34: #{local_topology_block_with_angle.3} parent=1 // pred_check
      %p71 = pneg %p70
    $region35: #{local_topology_block_with_angle.3} parent=1 // pred_check_branch
      %73 = sbr.rel (%p71) target = $region37
    $region36: #{local_topology_block_with_angle.3} parent=1 // pred_region
      %74 = vst [vmem:[#allocation10] sm:$0xff] 0.0
      %75 = vst [vmem:[#allocation10 + $0x8] sm:$0xff] 0.0
      %76 = vst [vmem:[#allocation10 + $0x10] sm:$0xff] 0.0
      %77 = vst [vmem:[#allocation10 + $0x18] sm:$0xff] 0.0
      %78 = vst [vmem:[#allocation10 + $0x20] sm:$0xff] 0.0
      %79 = vst [vmem:[#allocation10 + $0x28] sm:$0xff] 0.0
      %80 = vst [vmem:[#allocation10 + $0x30] sm:$0xff] 0.0
      %81 = vst [vmem:[#allocation10 + $0x38] sm:$0xff] 0.0
      %82 = vst [vmem:[#allocation10 + $0x40] sm:$0xff] 0.0
      %83 = vst [vmem:[#allocation10 + $0x48] sm:$0xff] 0.0
      %84 = vst [vmem:[#allocation10 + $0x50] sm:$0xff] 0.0
      %85 = vst [vmem:[#allocation10 + $0x58] sm:$0xff] 0.0
      %86 = vst [vmem:[#allocation10 + $0x60] sm:$0xff] 0.0
      %87 = vst [vmem:[#allocation10 + $0x68] sm:$0xff] 0.0
      %88 = vst [vmem:[#allocation10 + $0x70] sm:$0xff] 0.0
      %89 = vst [vmem:[#allocation10 + $0x78] sm:$0xff] 0.0
    $region37: #{local_topology_block_with_angle.3} parent=1 // pred_fallthru
      _
    %v90 = vld [vmem:[#allocation2] sm:$0xff]
    %v91 = vld [vmem:[#allocation2 + $0x8] sm:$0xff]
    %v92 = vld [vmem:[#allocation2 + $0x10] sm:$0xff]
    %v93 = vld [vmem:[#allocation2 + $0x18] sm:$0xff]
    %v94 = vld [vmem:[#allocation2 + $0x20] sm:$0xff]
    %v95 = vld [vmem:[#allocation2 + $0x28] sm:$0xff]
    %v96 = vld [vmem:[#allocation2 + $0x30] sm:$0xff]
    %v97 = vld [vmem:[#allocation2 + $0x38] sm:$0xff]
    %v98 = vld [vmem:[#allocation2 + $0x40] sm:$0xff]
    %v99 = vld [vmem:[#allocation2 + $0x48] sm:$0xff]
    %v100 = vld [vmem:[#allocation2 + $0x50] sm:$0xff]
    %v101 = vld [vmem:[#allocation2 + $0x58] sm:$0xff]
    %v102 = vld [vmem:[#allocation2 + $0x60] sm:$0xff]
    %v103 = vld [vmem:[#allocation2 + $0x68] sm:$0xff]
    %v104 = vld [vmem:[#allocation2 + $0x70] sm:$0xff]
    %v105 = vld [vmem:[#allocation2 + $0x78] sm:$0xff]
    %v106 = vld [vmem:[#allocation5] sm:$0xff]
    %vm107 = vcmask 64512
    %v109 = vsel %vm107, %v90, 0
    %v112 = vsel %vm107, %v91, 0
    %v115 = vsel %vm107, %v92, 0
    %v118 = vsel %vm107, %v93, 0
    %v121 = vsel %vm107, %v94, 0
    %v124 = vsel %vm107, %v95, 0
    %v127 = vsel %vm107, %v96, 0
    %v130 = vsel %vm107, %v97, 0
    %v133 = vsel %vm107, %v98, 0
    %v136 = vsel %vm107, %v99, 0
    %v139 = vsel %vm107, %v100, 0
    %v142 = vsel %vm107, %v101, 0
    %v145 = vsel %vm107, %v102, 0
    %v148 = vsel %vm107, %v103, 0
    %v151 = vsel %vm107, %v104, 0
    %v154 = vsel %vm107, %v105, 0
    %156 = vmatprep.subr.mxu0 0.0
    %157 = vmatpush1.msra.mxu0 %v106
    %158 = vmatprep.subr.mxu0 0.0
    %159 = vmatpush1.msra.mxu0 0.0
    %160 = vmatprep.subr.mxu0 0.0
    %161 = vmatpush1.msra.mxu0 0.0
    %162 = vmatprep.subr.mxu0 0.0
    %163 = vmatpush1.msra.mxu0 0.0
    %164 = vmatprep.subr.mxu0 0.0
    %165 = vmatpush1.msra.mxu0 0.0
    %166 = vmatprep.subr.mxu0 0.0
    %167 = vmatpush1.msra.mxu0 0.0
    %168 = vmatprep.subr.mxu0 0.0
    %169 = vmatpush1.msra.mxu0 0.0
    %170 = vmatprep.subr.mxu0 0.0
    %171 = vmatpush1.msra.mxu0 0.0
    %172 = vmatprep.subr.mxu0 0.0
    %173 = vmatpush1.msra.mxu0 0.0
    %174 = vmatprep.subr.mxu0 0.0
    %175 = vmatpush1.msra.mxu0 0.0
    %176 = vmatprep.subr.mxu0 0.0
    %177 = vmatpush1.msra.mxu0 0.0
    %178 = vmatprep.subr.mxu0 0.0
    %179 = vmatpush1.msra.mxu0 0.0
    %180 = vmatprep.subr.mxu0 0.0
    %181 = vmatpush1.msra.mxu0 0.0
    %182 = vmatprep.subr.mxu0 0.0
    %183 = vmatpush1.msra.mxu0 0.0
    %184 = vmatprep.subr.mxu0 0.0
    %185 = vmatpush1.msra.mxu0 0.0
    %186 = vmatprep.subr.mxu0 0.0
    %187 = vmatpush1.msra.mxu0 0.0
    %188 = vmatprep.subr.mxu0 0.0
    %189 = vmatpush1.msra.mxu0 0.0
    %190 = vmatprep.subr.mxu0 0.0
    %191 = vmatpush1.msra.mxu0 0.0
    %192 = vmatprep.subr.mxu0 0.0
    %193 = vmatpush1.msra.mxu0 0.0
    %194 = vmatprep.subr.mxu0 0.0
    %195 = vmatpush1.msra.mxu0 0.0
    %196 = vmatprep.subr.mxu0 0.0
    %197 = vmatpush1.msra.mxu0 0.0
    %198 = vmatprep.subr.mxu0 0.0
    %199 = vmatpush1.msra.mxu0 0.0
    %200 = vmatprep.subr.mxu0 0.0
    %201 = vmatpush1.msra.mxu0 0.0
    %202 = vmatprep.subr.mxu0 0.0
    %203 = vmatpush1.msra.mxu0 0.0
    %204 = vmatprep.subr.mxu0 0.0
    %205 = vmatpush1.msra.mxu0 0.0
    %206 = vmatprep.subr.mxu0 0.0
    %207 = vmatpush1.msra.mxu0 0.0
    %208 = vmatprep.subr.mxu0 0.0
    %209 = vmatpush1.msra.mxu0 0.0
    %210 = vmatprep.subr.mxu0 0.0
    %211 = vmatpush1.msra.mxu0 0.0
    %212 = vmatprep.subr.mxu0 0.0
    %213 = vmatpush1.msra.mxu0 0.0
    %214 = vmatprep.subr.mxu0 0.0
    %215 = vmatpush1.msra.mxu0 0.0
    %216 = vmatprep.subr.mxu0 0.0
    %217 = vmatpush1.msra.mxu0 0.0
    %218 = vmatprep.subr.mxu0 0.0
    %219 = vmatpush1.msra.mxu0 0.0
    %220 = vmatprep.mubr.f32.mxu0 0.0
    %221 = vmatmul.mubr.f32.gmra.mrb[0].mxu0 %v109
    %v222 = vpop.f32.mrb[0].mxu0
    %v223 = vadd.f32 0.0, %v222
    %v224 = vpop.f32.mrb[0].mxu0
    %225 = vmatprep.mubr.f32.mxu0 0.0
    %226 = vmatmul.mubr.f32.gmra.mrb[0].mxu0 %v112
    %v227 = vpop.f32.mrb[0].mxu0
    %v228 = vadd.f32 0.0, %v227
    %v229 = vpop.f32.mrb[0].mxu0
    %230 = vmatprep.mubr.f32.mxu0 0.0
    %231 = vmatmul.mubr.f32.gmra.mrb[0].mxu0 %v115
    %v232 = vpop.f32.mrb[0].mxu0
    %v233 = vadd.f32 0.0, %v232
    %v234 = vpop.f32.mrb[0].mxu0
    %235 = vmatprep.mubr.f32.mxu0 0.0
    %236 = vmatmul.mubr.f32.gmra.mrb[0].mxu0 %v118
    %v237 = vpop.f32.mrb[0].mxu0
    %v238 = vadd.f32 0.0, %v237
    %v239 = vpop.f32.mrb[0].mxu0
    %240 = vmatprep.mubr.f32.mxu0 0.0
    %241 = vmatmul.mubr.f32.gmra.mrb[0].mxu0 %v121
    %v242 = vpop.f32.mrb[0].mxu0
    %v243 = vadd.f32 0.0, %v242
    %v244 = vpop.f32.mrb[0].mxu0
    %245 = vmatprep.mubr.f32.mxu0 0.0
    %246 = vmatmul.mubr.f32.gmra.mrb[0].mxu0 %v124
    %v247 = vpop.f32.mrb[0].mxu0
    %v248 = vadd.f32 0.0, %v247
    %v249 = vpop.f32.mrb[0].mxu0
    %250 = vmatprep.mubr.f32.mxu0 0.0
    %251 = vmatmul.mubr.f32.gmra.mrb[0].mxu0 %v127
    %v252 = vpop.f32.mrb[0].mxu0
    %v253 = vadd.f32 0.0, %v252
    %v254 = vpop.f32.mrb[0].mxu0
    %255 = vmatprep.mubr.f32.mxu0 0.0
    %256 = vmatmul.mubr.f32.gmra.mrb[0].mxu0 %v130
    %v257 = vpop.f32.mrb[0].mxu0
    %v258 = vadd.f32 0.0, %v257
    %v259 = vpop.f32.mrb[0].mxu0
    %260 = vmatprep.mubr.f32.mxu0 0.0
    %261 = vmatmul.mubr.f32.gmra.mrb[0].mxu0 %v133
    %v262 = vpop.f32.mrb[0].mxu0
    %v263 = vadd.f32 0.0, %v262
    %v264 = vpop.f32.mrb[0].mxu0
    %265 = vmatprep.mubr.f32.mxu0 0.0
    %266 = vmatmul.mubr.f32.gmra.mrb[0].mxu0 %v136
    %v267 = vpop.f32.mrb[0].mxu0
    %v268 = vadd.f32 0.0, %v267
    %v269 = vpop.f32.mrb[0].mxu0
    %270 = vmatprep.mubr.f32.mxu0 0.0
    %271 = vmatmul.mubr.f32.gmra.mrb[0].mxu0 %v139
    %v272 = vpop.f32.mrb[0].mxu0
    %v273 = vadd.f32 0.0, %v272
    %v274 = vpop.f32.mrb[0].mxu0
    %275 = vmatprep.mubr.f32.mxu0 0.0
    %276 = vmatmul.mubr.f32.gmra.mrb[0].mxu0 %v142
    %v277 = vpop.f32.mrb[0].mxu0
    %v278 = vadd.f32 0.0, %v277
    %v279 = vpop.f32.mrb[0].mxu0
    %280 = vmatprep.mubr.f32.mxu0 0.0
    %281 = vmatmul.mubr.f32.gmra.mrb[0].mxu0 %v145
    %v282 = vpop.f32.mrb[0].mxu0
    %v283 = vadd.f32 0.0, %v282
    %v284 = vpop.f32.mrb[0].mxu0
    %285 = vmatprep.mubr.f32.mxu0 0.0
    %286 = vmatmul.mubr.f32.gmra.mrb[0].mxu0 %v148
    %v287 = vpop.f32.mrb[0].mxu0
    %v288 = vadd.f32 0.0, %v287
    %v289 = vpop.f32.mrb[0].mxu0
    %290 = vmatprep.mubr.f32.mxu0 0.0
    %291 = vmatmul.mubr.f32.gmra.mrb[0].mxu0 %v151
    %v292 = vpop.f32.mrb[0].mxu0
    %v293 = vadd.f32 0.0, %v292
    %v294 = vpop.f32.mrb[0].mxu0
    %295 = vmatprep.mubr.f32.mxu0 0.0
    %296 = vmatmul.mubr.f32.gmra.mrb[0].mxu0 %v154
    %v297 = vpop.f32.mrb[0].mxu0
    %v298 = vadd.f32 0.0, %v297
    %v299 = vpop.f32.mrb[0].mxu0
    %300 = vdwg.mxu0
    %v301 = vmul.f32 %v223, 0.2
    %v302 = vmul.f32 %v228, 0.2
    %v303 = vmul.f32 %v233, 0.2
    %v304 = vmul.f32 %v238, 0.2
    %v305 = vmul.f32 %v243, 0.2
    %v306 = vmul.f32 %v248, 0.2
    %v307 = vmul.f32 %v253, 0.2
    %v308 = vmul.f32 %v258, 0.2
    %v309 = vmul.f32 %v263, 0.2
    %v310 = vmul.f32 %v268, 0.2
    %v311 = vmul.f32 %v273, 0.2
    %v312 = vmul.f32 %v278, 0.2
    %v313 = vmul.f32 %v283, 0.2
    %v314 = vmul.f32 %v288, 0.2
    %v315 = vmul.f32 %v293, 0.2
    %v316 = vmul.f32 %v298, 0.2
    %v317 = vmax.f32 %v223, %v301
    %v318 = vmax.f32 %v228, %v302
    %v319 = vmax.f32 %v233, %v303
    %v320 = vmax.f32 %v238, %v304
    %v321 = vmax.f32 %v243, %v305
    %v322 = vmax.f32 %v248, %v306
    %v323 = vmax.f32 %v253, %v307
    %v324 = vmax.f32 %v258, %v308
    %v325 = vmax.f32 %v263, %v309
    %v326 = vmax.f32 %v268, %v310
    %v327 = vmax.f32 %v273, %v311
    %v328 = vmax.f32 %v278, %v312
    %v329 = vmax.f32 %v283, %v313
    %v330 = vmax.f32 %v288, %v314
    %v331 = vmax.f32 %v293, %v315
    %v332 = vmax.f32 %v298, %v316
    %v333 = vld [vmem:[#allocation7] sm:$0x1]
    %v335 = vlaneseq
    %v336 = vshrl.u32 %v335, 7
    %v337 = vsub.s32 0, %v336
    %v338 = vrot.slane %v333, %v337
    %v340 = vsub.f32 %v317, %v338
    %v341 = vsub.f32 %v318, %v338
    %v342 = vsub.f32 %v319, %v338
    %v343 = vsub.f32 %v320, %v338
    %v344 = vsub.f32 %v321, %v338
    %v345 = vsub.f32 %v322, %v338
    %v346 = vsub.f32 %v323, %v338
    %v347 = vsub.f32 %v324, %v338
    %v348 = vsub.f32 %v325, %v338
    %v349 = vsub.f32 %v326, %v338
    %v350 = vsub.f32 %v327, %v338
    %v351 = vsub.f32 %v328, %v338
    %v352 = vsub.f32 %v329, %v338
    %v353 = vsub.f32 %v330, %v338
    %v354 = vsub.f32 %v331, %v338
    %v355 = vsub.f32 %v332, %v338
    %v356 = vmul.f32 %v340, 1.442695
    %v357 = vpow.pop %v356
    %v358 = vmul.f32 %v341, 1.442695
    %v359 = vpow.pop %v358
    %v360 = vmul.f32 %v342, 1.442695
    %v361 = vpow.pop %v360
    %v362 = vmul.f32 %v343, 1.442695
    %v363 = vpow.pop %v362
    %v364 = vmul.f32 %v344, 1.442695
    %v365 = vpow.pop %v364
    %v366 = vmul.f32 %v345, 1.442695
    %v367 = vpow.pop %v366
    %v368 = vmul.f32 %v346, 1.442695
    %v369 = vpow.pop %v368
    %v370 = vmul.f32 %v347, 1.442695
    %v371 = vpow.pop %v370
    %v372 = vmul.f32 %v348, 1.442695
    %v373 = vpow.pop %v372
    %v374 = vmul.f32 %v349, 1.442695
    %v375 = vpow.pop %v374
    %v376 = vmul.f32 %v350, 1.442695
    %v377 = vpow.pop %v376
    %v378 = vmul.f32 %v351, 1.442695
    %v379 = vpow.pop %v378
    %v380 = vmul.f32 %v352, 1.442695
    %v381 = vpow.pop %v380
    %v382 = vmul.f32 %v353, 1.442695
    %v383 = vpow.pop %v382
    %v384 = vmul.f32 %v354, 1.442695
    %v385 = vpow.pop %v384
    %v386 = vmul.f32 %v355, 1.442695
    %v387 = vpow.pop %v386
    %v388 = vld [vmem:[#allocation10] sm:$0xff]
    %v389 = vld [vmem:[#allocation10 + $0x8] sm:$0xff]
    %v390 = vld [vmem:[#allocation10 + $0x10] sm:$0xff]
    %v391 = vld [vmem:[#allocation10 + $0x18] sm:$0xff]
    %v392 = vld [vmem:[#allocation10 + $0x20] sm:$0xff]
    %v393 = vld [vmem:[#allocation10 + $0x28] sm:$0xff]
    %v394 = vld [vmem:[#allocation10 + $0x30] sm:$0xff]
    %v395 = vld [vmem:[#allocation10 + $0x38] sm:$0xff]
    %v396 = vld [vmem:[#allocation10 + $0x40] sm:$0xff]
    %v397 = vld [vmem:[#allocation10 + $0x48] sm:$0xff]
    %v398 = vld [vmem:[#allocation10 + $0x50] sm:$0xff]
    %v399 = vld [vmem:[#allocation10 + $0x58] sm:$0xff]
    %v400 = vld [vmem:[#allocation10 + $0x60] sm:$0xff]
    %v401 = vld [vmem:[#allocation10 + $0x68] sm:$0xff]
    %v402 = vld [vmem:[#allocation10 + $0x70] sm:$0xff]
    %v403 = vld [vmem:[#allocation10 + $0x78] sm:$0xff]
    %v404 = vpack.c.bf16 %v359, %v357
    %v405 = vpack.c.bf16 %v363, %v361
    %v406 = vpack.c.bf16 %v367, %v365
    %v407 = vpack.c.bf16 %v371, %v369
    %v408 = vpack.c.bf16 %v375, %v373
    %v409 = vpack.c.bf16 %v379, %v377
    %v410 = vpack.c.bf16 %v383, %v381
    %v411 = vpack.c.bf16 %v387, %v385
    %v412 = vld [vmem:[#allocation8] sm:$0xf]
    %v413 = vld [vmem:[#allocation8 + $0x4] sm:$0xf]
    %v414 = vld [vmem:[#allocation8 + $0x8] sm:$0xf]
    %v415 = vld [vmem:[#allocation8 + $0xc] sm:$0xf]
    %v416 = vld [vmem:[#allocation8 + $0x10] sm:$0xf]
    %v417 = vld [vmem:[#allocation8 + $0x14] sm:$0xf]
    %v418 = vld [vmem:[#allocation8 + $0x18] sm:$0xf]
    %v419 = vld [vmem:[#allocation8 + $0x1c] sm:$0xf]
    %v420 = vld [vmem:[#allocation8 + $0x20] sm:$0xf]
    %v421 = vld [vmem:[#allocation8 + $0x24] sm:$0xf]
    %v422 = vld [vmem:[#allocation8 + $0x28] sm:$0xf]
    %v423 = vld [vmem:[#allocation8 + $0x2c] sm:$0xf]
    %v424 = vld [vmem:[#allocation8 + $0x30] sm:$0xf]
    %v425 = vld [vmem:[#allocation8 + $0x34] sm:$0xf]
    %v426 = vld [vmem:[#allocation8 + $0x38] sm:$0xf]
    %v427 = vld [vmem:[#allocation8 + $0x3c] sm:$0xf]
    %v444 = vunpack.c.l.b16 %v412
    %v445 = vunpack.c.l.b16 %v413
    %v446 = vunpack.c.l.b16 %v414
    %v447 = vunpack.c.l.b16 %v415
    %v448 = vunpack.c.l.b16 %v416
    %v449 = vunpack.c.l.b16 %v417
    %v450 = vunpack.c.l.b16 %v418
    %v451 = vunpack.c.l.b16 %v419
    %v452 = vunpack.c.l.b16 %v420
    %v453 = vunpack.c.l.b16 %v421
    %v454 = vunpack.c.l.b16 %v422
    %v455 = vunpack.c.l.b16 %v423
    %v456 = vunpack.c.l.b16 %v424
    %v457 = vunpack.c.l.b16 %v425
    %v458 = vunpack.c.l.b16 %v426
    %v459 = vunpack.c.l.b16 %v427
    %v460 = vpack.c.b16 %v445, %v444
    %v461 = vpack.c.b16 %v447, %v446
    %v462 = vpack.c.b16 %v449, %v448
    %v463 = vpack.c.b16 %v451, %v450
    %v464 = vpack.c.b16 %v453, %v452
    %v465 = vpack.c.b16 %v455, %v454
    %v466 = vpack.c.b16 %v457, %v456
    %v467 = vpack.c.b16 %v459, %v458
    %476 = vmatprep.subr.bf16.mxu0 0
    %477 = vmatpush1.bf16.msra.mxu0 %v460
    %478 = vmatprep.subr.bf16.mxu0 0
    %479 = vmatpush1.bf16.msra.mxu0 %v461
    %480 = vmatprep.subr.bf16.mxu0 0
    %481 = vmatpush1.bf16.msra.mxu0 %v462
    %482 = vmatprep.subr.bf16.mxu0 0
    %483 = vmatpush1.bf16.msra.mxu0 %v463
    %484 = vmatprep.subr.bf16.mxu0 0
    %485 = vmatpush1.bf16.msra.mxu0 %v464
    %486 = vmatprep.subr.bf16.mxu0 0
    %487 = vmatpush1.bf16.msra.mxu0 %v465
    %488 = vmatprep.subr.bf16.mxu0 0
    %489 = vmatpush1.bf16.msra.mxu0 %v466
    %490 = vmatprep.subr.bf16.mxu0 0
    %491 = vmatpush1.bf16.msra.mxu0 %v467
    %492 = vmatprep.subr.bf16.mxu0 0
    %493 = vmatpush1.bf16.msra.mxu0 0
    %494 = vmatprep.subr.bf16.mxu0 0
    %495 = vmatpush1.bf16.msra.mxu0 0
    %496 = vmatprep.subr.bf16.mxu0 0
    %497 = vmatpush1.bf16.msra.mxu0 0
    %498 = vmatprep.subr.bf16.mxu0 0
    %499 = vmatpush1.bf16.msra.mxu0 0
    %500 = vmatprep.subr.bf16.mxu0 0
    %501 = vmatpush1.bf16.msra.mxu0 0
    %502 = vmatprep.subr.bf16.mxu0 0
    %503 = vmatpush1.bf16.msra.mxu0 0
    %504 = vmatprep.subr.bf16.mxu0 0
    %505 = vmatpush1.bf16.msra.mxu0 0
    %506 = vmatprep.subr.bf16.mxu0 0
    %507 = vmatpush1.bf16.msra.mxu0 0
    %508 = vmatprep.mubr.bf16.mxu0 0
    %509 = vmatmul.mubr.bf16.gmra.mrb[0].mxu0 %v404
    %v510 = vpop.f32.mrb[0].mxu0
    %v511 = vadd.f32 0.0, %v510
    %v512 = vpop.f32.mrb[0].mxu0
    %v513 = vpop.f32.mrb[0].mxu0
    %v514 = vadd.f32 0.0, %v513
    %v515 = vpop.f32.mrb[0].mxu0
    %516 = vmatprep.mubr.bf16.mxu0 0
    %517 = vmatmul.mubr.bf16.gmra.mrb[0].mxu0 %v405
    %v518 = vpop.f32.mrb[0].mxu0
    %v519 = vadd.f32 0.0, %v518
    %v520 = vpop.f32.mrb[0].mxu0
    %v521 = vpop.f32.mrb[0].mxu0
    %v522 = vadd.f32 0.0, %v521
    %v523 = vpop.f32.mrb[0].mxu0
    %524 = vmatprep.mubr.bf16.mxu0 0
    %525 = vmatmul.mubr.bf16.gmra.mrb[0].mxu0 %v406
    %v526 = vpop.f32.mrb[0].mxu0
    %v527 = vadd.f32 0.0, %v526
    %v528 = vpop.f32.mrb[0].mxu0
    %v529 = vpop.f32.mrb[0].mxu0
    %v530 = vadd.f32 0.0, %v529
    %v531 = vpop.f32.mrb[0].mxu0
    %532 = vmatprep.mubr.bf16.mxu0 0
    %533 = vmatmul.mubr.bf16.gmra.mrb[0].mxu0 %v407
    %v534 = vpop.f32.mrb[0].mxu0
    %v535 = vadd.f32 0.0, %v534
    %v536 = vpop.f32.mrb[0].mxu0
    %v537 = vpop.f32.mrb[0].mxu0
    %v538 = vadd.f32 0.0, %v537
    %v539 = vpop.f32.mrb[0].mxu0
    %540 = vmatprep.mubr.bf16.mxu0 0
    %541 = vmatmul.mubr.bf16.gmra.mrb[0].mxu0 %v408
    %v542 = vpop.f32.mrb[0].mxu0
    %v543 = vadd.f32 0.0, %v542
    %v544 = vpop.f32.mrb[0].mxu0
    %v545 = vpop.f32.mrb[0].mxu0
    %v546 = vadd.f32 0.0, %v545
    %v547 = vpop.f32.mrb[0].mxu0
    %548 = vmatprep.mubr.bf16.mxu0 0
    %549 = vmatmul.mubr.bf16.gmra.mrb[0].mxu0 %v409
    %v550 = vpop.f32.mrb[0].mxu0
    %v551 = vadd.f32 0.0, %v550
    %v552 = vpop.f32.mrb[0].mxu0
    %v553 = vpop.f32.mrb[0].mxu0
    %v554 = vadd.f32 0.0, %v553
    %v555 = vpop.f32.mrb[0].mxu0
    %556 = vmatprep.mubr.bf16.mxu0 0
    %557 = vmatmul.mubr.bf16.gmra.mrb[0].mxu0 %v410
    %v558 = vpop.f32.mrb[0].mxu0
    %v559 = vadd.f32 0.0, %v558
    %v560 = vpop.f32.mrb[0].mxu0
    %v561 = vpop.f32.mrb[0].mxu0
    %v562 = vadd.f32 0.0, %v561
    %v563 = vpop.f32.mrb[0].mxu0
    %564 = vmatprep.mubr.bf16.mxu0 0
    %565 = vmatmul.mubr.bf16.gmra.mrb[0].mxu0 %v411
    %v566 = vpop.f32.mrb[0].mxu0
    %v567 = vadd.f32 0.0, %v566
    %v568 = vpop.f32.mrb[0].mxu0
    %v569 = vpop.f32.mrb[0].mxu0
    %v570 = vadd.f32 0.0, %v569
    %v571 = vpop.f32.mrb[0].mxu0
    %572 = vdwg.mxu0
    %v573 = vadd.f32 %v388, %v511
    %v574 = vadd.f32 %v389, %v514
    %v575 = vadd.f32 %v390, %v519
    %v576 = vadd.f32 %v391, %v522
    %v577 = vadd.f32 %v392, %v527
    %v578 = vadd.f32 %v393, %v530
    %v579 = vadd.f32 %v394, %v535
    %v580 = vadd.f32 %v395, %v538
    %v581 = vadd.f32 %v396, %v543
    %v582 = vadd.f32 %v397, %v546
    %v583 = vadd.f32 %v398, %v551
    %v584 = vadd.f32 %v399, %v554
    %v585 = vadd.f32 %v400, %v559
    %v586 = vadd.f32 %v401, %v562
    %v587 = vadd.f32 %v402, %v567
    %v588 = vadd.f32 %v403, %v570
    %589 = vst [vmem:[#allocation10] sm:$0xff] %v573
    %590 = vst [vmem:[#allocation10 + $0x8] sm:$0xff] %v574
    %591 = vst [vmem:[#allocation10 + $0x10] sm:$0xff] %v575
    %592 = vst [vmem:[#allocation10 + $0x18] sm:$0xff] %v576
    %593 = vst [vmem:[#allocation10 + $0x20] sm:$0xff] %v577
    %594 = vst [vmem:[#allocation10 + $0x28] sm:$0xff] %v578
    %595 = vst [vmem:[#allocation10 + $0x30] sm:$0xff] %v579
    %596 = vst [vmem:[#allocation10 + $0x38] sm:$0xff] %v580
    %597 = vst [vmem:[#allocation10 + $0x40] sm:$0xff] %v581
    %598 = vst [vmem:[#allocation10 + $0x48] sm:$0xff] %v582
    %599 = vst [vmem:[#allocation10 + $0x50] sm:$0xff] %v583
    %600 = vst [vmem:[#allocation10 + $0x58] sm:$0xff] %v584
    %601 = vst [vmem:[#allocation10 + $0x60] sm:$0xff] %v585
    %602 = vst [vmem:[#allocation10 + $0x68] sm:$0xff] %v586
    %603 = vst [vmem:[#allocation10 + $0x70] sm:$0xff] %v587
    %604 = vst [vmem:[#allocation10 + $0x78] sm:$0xff] %v588
    // Predicated region
    $region38: #{local_topology_block_with_angle.3} parent=1 // pred_check
      _
    $region39: #{local_topology_block_with_angle.3} parent=1 // pred_check_branch
      %606 = sbr.rel (0) target = $region41
    $region40: #{local_topology_block_with_angle.3} parent=1 // pred_region
      %s608 = ssub.s32 2048, 2048
      %609 = vsyncadd [#allocation4], %s608
      %s610 = sshll.u32 [#allocation10], 4
      %s611 = int_to_ptr.vmem [resolvable:$true] %s610
      %616 = dma.vmem_to_hbm [thread:$0]  %s611, 2048, %s4, [#allocation4], 128, 128, 8
    $region41: #{local_topology_block_with_angle.3} parent=1 // pred_fallthru
      _
    // Predicated region
    $region42: #{local_topology_block_with_angle.3} parent=1 // pred_check
      _
    $region43: #{local_topology_block_with_angle.3} parent=1 // pred_check_branch
      %618 = sbr.rel (0) target = $region45
    $region44: #{local_topology_block_with_angle.3} parent=1 // pred_region
      %619 = dma.done [#allocation4], 2048
    $region45: #{local_topology_block_with_angle.3} parent=1 // pred_fallthru
      _
    %620 = vsyncpa [#allocation3], 1
    %621 = vsyncpa [#allocation6], 1
    %622 = vsyncpa [#allocation9], 1
    %623 = vsyncpa [#allocation4], 1

// kernel: local_topology_block_with_angle.2
$region0: #{local_topology_block_with_angle.2}
  #allocation0 [shape = 'u32[]', space=smem, size = 0x4, offset = 0x4, fixed_abs, tag = 'smem constant byte address 0x4 - core index']
  #allocation1 [shape = 'u32[144,128]{1,0:T(1,128)}', space=vmem, size = 0x12000, scoped, tag = 'internal scratch']
  %s0 = inlined_call_operand.hbm [shape: f32[128,8], index: 0, kind: input, shape index: {}]
  %s1 = inlined_call_operand.hbm [shape: f32[8,128], index: 1, kind: input, shape index: {}]
  %s2 = inlined_call_operand.hbm [shape: f32[2,128], index: 2, kind: output, shape index: {}]
  %s3 = sld [smem:[#allocation0]]
  $region30: #{local_topology_block_with_angle.2} parent=0
    _
  %s5 = ssub.s32 1, %s3
  %s6 = scalar_select 0, %s5, %s3
  $region1: #{local_topology_block_with_angle.2} parent=0
    #allocation2 [shape = 'u8[65536]{0}', space=vmem, size = 0x10000, scoped, tag = 'input window, operand 0, single buffered']
    #allocation3 [shape = 's32[1]{0}', space=sflag, size = 0x4, scoped, tag = 'scoped memory for local_topology_block_with_angle.2']
    #allocation4 [shape = 's32[1]{0}', space=sflag, size = 0x4, scoped, tag = 'scoped memory for local_topology_block_with_angle.2']
    #allocation5 [shape = 'u8[4096]{0}', space=vmem, size = 0x1000, scoped, tag = 'input window, operand 1, single buffered']
    #allocation6 [shape = 's32[1]{0}', space=sflag, size = 0x4, scoped, tag = 'scoped memory for local_topology_block_with_angle.2']
    #allocation7 [shape = 'u8[1024]{0}', space=vmem, size = 0x400, scoped, tag = 'output window, operand 0, single buffered']
    %7 = vsyncpa [#allocation3], 0
    %8 = vsyncpa [#allocation6], 0
    %9 = vsyncpa [#allocation4], 0
    // Predicated region
    $region2: #{local_topology_block_with_angle.2} parent=1 // pred_check
      _
    $region3: #{local_topology_block_with_angle.2} parent=1 // pred_check_branch
      %11 = sbr.rel (0) target = $region5
    $region4: #{local_topology_block_with_angle.2} parent=1 // pred_region
      %s13 = ssub.s32 2048, 2048
      %14 = vsyncadd [#allocation3], %s13
      %s15 = sshll.u32 [#allocation2], 4
      %s16 = int_to_ptr.vmem [resolvable:$true] %s15
      %21 = dma.hbm_to_vmem [thread:$0]  %s0, 2048, %s16, [#allocation3], 128, 128, 8
    $region5: #{local_topology_block_with_angle.2} parent=1 // pred_fallthru
      _
    // Predicated region
    $region6: #{local_topology_block_with_angle.2} parent=1 // pred_check
      _
    $region7: #{local_topology_block_with_angle.2} parent=1 // pred_check_branch
      %23 = sbr.rel (0) target = $region9
    $region8: #{local_topology_block_with_angle.2} parent=1 // pred_region
      %s25 = ssub.s32 128, 128
      %26 = vsyncadd [#allocation6], %s25
      %s28 = sshll.u32 [#allocation5], 4
      %s29 = int_to_ptr.vmem [resolvable:$true] %s28
      %31 = dma.hbm_to_vmem [thread:$0]  %s1, 128, %s29, [#allocation6]
    $region9: #{local_topology_block_with_angle.2} parent=1 // pred_fallthru
      _
    // Predicated region
    $region10: #{local_topology_block_with_angle.2} parent=1 // pred_check
      _
    $region11: #{local_topology_block_with_angle.2} parent=1 // pred_check_branch
      %33 = sbr.rel (0) target = $region13
    $region12: #{local_topology_block_with_angle.2} parent=1 // pred_region
      %34 = dma.done [#allocation3], 2048
    $region13: #{local_topology_block_with_angle.2} parent=1 // pred_fallthru
      _
    // Predicated region
    $region14: #{local_topology_block_with_angle.2} parent=1 // pred_check
      _
    $region15: #{local_topology_block_with_angle.2} parent=1 // pred_check_branch
      %36 = sbr.rel (0) target = $region17
    $region16: #{local_topology_block_with_angle.2} parent=1 // pred_region
      %37 = dma.done [#allocation6], 128
    $region17: #{local_topology_block_with_angle.2} parent=1 // pred_fallthru
      _
    %v38 = vld [vmem:[#allocation2] sm:$0xff]
    %v39 = vld [vmem:[#allocation2 + $0x8] sm:$0xff]
    %v40 = vld [vmem:[#allocation2 + $0x10] sm:$0xff]
    %v41 = vld [vmem:[#allocation2 + $0x18] sm:$0xff]
    %v42 = vld [vmem:[#allocation2 + $0x20] sm:$0xff]
    %v43 = vld [vmem:[#allocation2 + $0x28] sm:$0xff]
    %v44 = vld [vmem:[#allocation2 + $0x30] sm:$0xff]
    %v45 = vld [vmem:[#allocation2 + $0x38] sm:$0xff]
    %v46 = vld [vmem:[#allocation2 + $0x40] sm:$0xff]
    %v47 = vld [vmem:[#allocation2 + $0x48] sm:$0xff]
    %v48 = vld [vmem:[#allocation2 + $0x50] sm:$0xff]
    %v49 = vld [vmem:[#allocation2 + $0x58] sm:$0xff]
    %v50 = vld [vmem:[#allocation2 + $0x60] sm:$0xff]
    %v51 = vld [vmem:[#allocation2 + $0x68] sm:$0xff]
    %v52 = vld [vmem:[#allocation2 + $0x70] sm:$0xff]
    %v53 = vld [vmem:[#allocation2 + $0x78] sm:$0xff]
    %v54 = vld [vmem:[#allocation5] sm:$0xff]
    %vm55 = vcmask 64512
    %v57 = vsel %vm55, %v38, 0
    %v60 = vsel %vm55, %v39, 0
    %v63 = vsel %vm55, %v40, 0
    %v66 = vsel %vm55, %v41, 0
    %v69 = vsel %vm55, %v42, 0
    %v72 = vsel %vm55, %v43, 0
    %v75 = vsel %vm55, %v44, 0
    %v78 = vsel %vm55, %v45, 0
    %v81 = vsel %vm55, %v46, 0
    %v84 = vsel %vm55, %v47, 0
    %v87 = vsel %vm55, %v48, 0
    %v90 = vsel %vm55, %v49, 0
    %v93 = vsel %vm55, %v50, 0
    %v96 = vsel %vm55, %v51, 0
    %v99 = vsel %vm55, %v52, 0
    %v102 = vsel %vm55, %v53, 0
    %104 = vmatprep.subr.mxu0 0.0
    %105 = vmatpush1.msra.mxu0 %v54
    %106 = vmatprep.subr.mxu0 0.0
    %107 = vmatpush1.msra.mxu0 0.0
    %108 = vmatprep.subr.mxu0 0.0
    %109 = vmatpush1.msra.mxu0 0.0
    %110 = vmatprep.subr.mxu0 0.0
    %111 = vmatpush1.msra.mxu0 0.0
    %112 = vmatprep.subr.mxu0 0.0
    %113 = vmatpush1.msra.mxu0 0.0
    %114 = vmatprep.subr.mxu0 0.0
    %115 = vmatpush1.msra.mxu0 0.0
    %116 = vmatprep.subr.mxu0 0.0
    %117 = vmatpush1.msra.mxu0 0.0
    %118 = vmatprep.subr.mxu0 0.0
    %119 = vmatpush1.msra.mxu0 0.0
    %120 = vmatprep.subr.mxu0 0.0
    %121 = vmatpush1.msra.mxu0 0.0
    %122 = vmatprep.subr.mxu0 0.0
    %123 = vmatpush1.msra.mxu0 0.0
    %124 = vmatprep.subr.mxu0 0.0
    %125 = vmatpush1.msra.mxu0 0.0
    %126 = vmatprep.subr.mxu0 0.0
    %127 = vmatpush1.msra.mxu0 0.0
    %128 = vmatprep.subr.mxu0 0.0
    %129 = vmatpush1.msra.mxu0 0.0
    %130 = vmatprep.subr.mxu0 0.0
    %131 = vmatpush1.msra.mxu0 0.0
    %132 = vmatprep.subr.mxu0 0.0
    %133 = vmatpush1.msra.mxu0 0.0
    %134 = vmatprep.subr.mxu0 0.0
    %135 = vmatpush1.msra.mxu0 0.0
    %136 = vmatprep.subr.mxu0 0.0
    %137 = vmatpush1.msra.mxu0 0.0
    %138 = vmatprep.subr.mxu0 0.0
    %139 = vmatpush1.msra.mxu0 0.0
    %140 = vmatprep.subr.mxu0 0.0
    %141 = vmatpush1.msra.mxu0 0.0
    %142 = vmatprep.subr.mxu0 0.0
    %143 = vmatpush1.msra.mxu0 0.0
    %144 = vmatprep.subr.mxu0 0.0
    %145 = vmatpush1.msra.mxu0 0.0
    %146 = vmatprep.subr.mxu0 0.0
    %147 = vmatpush1.msra.mxu0 0.0
    %148 = vmatprep.subr.mxu0 0.0
    %149 = vmatpush1.msra.mxu0 0.0
    %150 = vmatprep.subr.mxu0 0.0
    %151 = vmatpush1.msra.mxu0 0.0
    %152 = vmatprep.subr.mxu0 0.0
    %153 = vmatpush1.msra.mxu0 0.0
    %154 = vmatprep.subr.mxu0 0.0
    %155 = vmatpush1.msra.mxu0 0.0
    %156 = vmatprep.subr.mxu0 0.0
    %157 = vmatpush1.msra.mxu0 0.0
    %158 = vmatprep.subr.mxu0 0.0
    %159 = vmatpush1.msra.mxu0 0.0
    %160 = vmatprep.subr.mxu0 0.0
    %161 = vmatpush1.msra.mxu0 0.0
    %162 = vmatprep.subr.mxu0 0.0
    %163 = vmatpush1.msra.mxu0 0.0
    %164 = vmatprep.subr.mxu0 0.0
    %165 = vmatpush1.msra.mxu0 0.0
    %166 = vmatprep.subr.mxu0 0.0
    %167 = vmatpush1.msra.mxu0 0.0
    %168 = vmatprep.mubr.f32.mxu0 0.0
    %169 = vmatmul.mubr.f32.gmra.mrb[0].mxu0 %v57
    %v170 = vpop.f32.mrb[0].mxu0
    %v171 = vadd.f32 0.0, %v170
    %v172 = vpop.f32.mrb[0].mxu0
    %173 = vmatprep.mubr.f32.mxu0 0.0
    %174 = vmatmul.mubr.f32.gmra.mrb[0].mxu0 %v60
    %v175 = vpop.f32.mrb[0].mxu0
    %v176 = vadd.f32 0.0, %v175
    %v177 = vpop.f32.mrb[0].mxu0
    %178 = vmatprep.mubr.f32.mxu0 0.0
    %179 = vmatmul.mubr.f32.gmra.mrb[0].mxu0 %v63
    %v180 = vpop.f32.mrb[0].mxu0
    %v181 = vadd.f32 0.0, %v180
    %v182 = vpop.f32.mrb[0].mxu0
    %183 = vmatprep.mubr.f32.mxu0 0.0
    %184 = vmatmul.mubr.f32.gmra.mrb[0].mxu0 %v66
    %v185 = vpop.f32.mrb[0].mxu0
    %v186 = vadd.f32 0.0, %v185
    %v187 = vpop.f32.mrb[0].mxu0
    %188 = vmatprep.mubr.f32.mxu0 0.0
    %189 = vmatmul.mubr.f32.gmra.mrb[0].mxu0 %v69
    %v190 = vpop.f32.mrb[0].mxu0
    %v191 = vadd.f32 0.0, %v190
    %v192 = vpop.f32.mrb[0].mxu0
    %193 = vmatprep.mubr.f32.mxu0 0.0
    %194 = vmatmul.mubr.f32.gmra.mrb[0].mxu0 %v72
    %v195 = vpop.f32.mrb[0].mxu0
    %v196 = vadd.f32 0.0, %v195
    %v197 = vpop.f32.mrb[0].mxu0
    %198 = vmatprep.mubr.f32.mxu0 0.0
    %199 = vmatmul.mubr.f32.gmra.mrb[0].mxu0 %v75
    %v200 = vpop.f32.mrb[0].mxu0
    %v201 = vadd.f32 0.0, %v200
    %v202 = vpop.f32.mrb[0].mxu0
    %203 = vmatprep.mubr.f32.mxu0 0.0
    %204 = vmatmul.mubr.f32.gmra.mrb[0].mxu0 %v78
    %v205 = vpop.f32.mrb[0].mxu0
    %v206 = vadd.f32 0.0, %v205
    %v207 = vpop.f32.mrb[0].mxu0
    %208 = vmatprep.mubr.f32.mxu0 0.0
    %209 = vmatmul.mubr.f32.gmra.mrb[0].mxu0 %v81
    %v210 = vpop.f32.mrb[0].mxu0
    %v211 = vadd.f32 0.0, %v210
    %v212 = vpop.f32.mrb[0].mxu0
    %213 = vmatprep.mubr.f32.mxu0 0.0
    %214 = vmatmul.mubr.f32.gmra.mrb[0].mxu0 %v84
    %v215 = vpop.f32.mrb[0].mxu0
    %v216 = vadd.f32 0.0, %v215
    %v217 = vpop.f32.mrb[0].mxu0
    %218 = vmatprep.mubr.f32.mxu0 0.0
    %219 = vmatmul.mubr.f32.gmra.mrb[0].mxu0 %v87
    %v220 = vpop.f32.mrb[0].mxu0
    %v221 = vadd.f32 0.0, %v220
    %v222 = vpop.f32.mrb[0].mxu0
    %223 = vmatprep.mubr.f32.mxu0 0.0
    %224 = vmatmul.mubr.f32.gmra.mrb[0].mxu0 %v90
    %v225 = vpop.f32.mrb[0].mxu0
    %v226 = vadd.f32 0.0, %v225
    %v227 = vpop.f32.mrb[0].mxu0
    %228 = vmatprep.mubr.f32.mxu0 0.0
    %229 = vmatmul.mubr.f32.gmra.mrb[0].mxu0 %v93
    %v230 = vpop.f32.mrb[0].mxu0
    %v231 = vadd.f32 0.0, %v230
    %v232 = vpop.f32.mrb[0].mxu0
    %233 = vmatprep.mubr.f32.mxu0 0.0
    %234 = vmatmul.mubr.f32.gmra.mrb[0].mxu0 %v96
    %v235 = vpop.f32.mrb[0].mxu0
    %v236 = vadd.f32 0.0, %v235
    %v237 = vpop.f32.mrb[0].mxu0
    %238 = vmatprep.mubr.f32.mxu0 0.0
    %239 = vmatmul.mubr.f32.gmra.mrb[0].mxu0 %v99
    %v240 = vpop.f32.mrb[0].mxu0
    %v241 = vadd.f32 0.0, %v240
    %v242 = vpop.f32.mrb[0].mxu0
    %243 = vmatprep.mubr.f32.mxu0 0.0
    %244 = vmatmul.mubr.f32.gmra.mrb[0].mxu0 %v102
    %v245 = vpop.f32.mrb[0].mxu0
    %v246 = vadd.f32 0.0, %v245
    %v247 = vpop.f32.mrb[0].mxu0
    %248 = vdwg.mxu0
    %v249 = vmul.f32 %v171, 0.2
    %v250 = vmul.f32 %v176, 0.2
    %v251 = vmul.f32 %v181, 0.2
    %v252 = vmul.f32 %v186, 0.2
    %v253 = vmul.f32 %v191, 0.2
    %v254 = vmul.f32 %v196, 0.2
    %v255 = vmul.f32 %v201, 0.2
    %v256 = vmul.f32 %v206, 0.2
    %v257 = vmul.f32 %v211, 0.2
    %v258 = vmul.f32 %v216, 0.2
    %v259 = vmul.f32 %v221, 0.2
    %v260 = vmul.f32 %v226, 0.2
    %v261 = vmul.f32 %v231, 0.2
    %v262 = vmul.f32 %v236, 0.2
    %v263 = vmul.f32 %v241, 0.2
    %v264 = vmul.f32 %v246, 0.2
    %v265 = vmax.f32 %v171, %v249
    %v266 = vmax.f32 %v176, %v250
    %v267 = vmax.f32 %v181, %v251
    %v268 = vmax.f32 %v186, %v252
    %v269 = vmax.f32 %v191, %v253
    %v270 = vmax.f32 %v196, %v254
    %v271 = vmax.f32 %v201, %v255
    %v272 = vmax.f32 %v206, %v256
    %v273 = vmax.f32 %v211, %v257
    %v274 = vmax.f32 %v216, %v258
    %v275 = vmax.f32 %v221, %v259
    %v276 = vmax.f32 %v226, %v260
    %v277 = vmax.f32 %v231, %v261
    %v278 = vmax.f32 %v236, %v262
    %v279 = vmax.f32 %v241, %v263
    %v280 = vmax.f32 %v246, %v264
    %v281 = vmax.f32 %v265, %v269
    %v282 = vmax.f32 %v266, %v270
    %v283 = vmax.f32 %v267, %v271
    %v284 = vmax.f32 %v268, %v272
    %v285 = vmax.f32 %v281, %v273
    %v286 = vmax.f32 %v282, %v274
    %v287 = vmax.f32 %v283, %v275
    %v288 = vmax.f32 %v284, %v276
    %v289 = vmax.f32 %v285, %v277
    %v290 = vmax.f32 %v286, %v278
    %v291 = vmax.f32 %v287, %v279
    %v292 = vmax.f32 %v288, %v280
    %v293 = vmax.f32 %v289, %v290
    %v294 = vmax.f32 %v291, %v292
    %v295 = vmax.f32 %v293, %v294
    %v296 = vrot.slane %v295, 4
    %v297 = vmax.f32 %v295, %v296
    %v298 = vrot.slane %v297, 2
    %v299 = vmax.f32 %v297, %v298
    %v300 = vrot.slane %v299, 1
    %v301 = vmax.f32 %v299, %v300
    %p302 = scmp.eq.s32.totalorder 0, 0
    // Predicated region
    $region18: #{local_topology_block_with_angle.2} parent=1 // pred_check
      %p303 = pneg %p302
    $region19: #{local_topology_block_with_angle.2} parent=1 // pred_check_branch
      %305 = sbr.rel (%p303) target = $region21
    $region20: #{local_topology_block_with_angle.2} parent=1 // pred_region
      %306 = vst [vmem:[#allocation7] sm:$0x1] -1e+30
      %307 = vst [vmem:[#allocation7 + $0x1] sm:$0x1] 0.0
    $region21: #{local_topology_block_with_angle.2} parent=1 // pred_fallthru
      _
    %v308 = vld [vmem:[#allocation7] sm:$0x1]
    %v309 = vld [vmem:[#allocation7 + $0x1] sm:$0x1]
    %v310 = vmax.f32 %v308, %v301
    %v311 = vsub.f32 %v308, %v310
    %v312 = vmul.f32 %v311, 1.442695
    %v313 = vpow.pop %v312
    %v314 = vmul.f32 %v309, %v313
    %v315 = vlaneseq
    %v316 = vshrl.u32 %v315, 7
    %v317 = vsub.s32 0, %v316
    %v318 = vrot.slane %v310, %v317
    %v319 = vsub.f32 %v265, %v318
    %v320 = vsub.f32 %v266, %v318
    %v321 = vsub.f32 %v267, %v318
    %v322 = vsub.f32 %v268, %v318
    %v323 = vsub.f32 %v269, %v318
    %v324 = vsub.f32 %v270, %v318
    %v325 = vsub.f32 %v271, %v318
    %v326 = vsub.f32 %v272, %v318
    %v327 = vsub.f32 %v273, %v318
    %v328 = vsub.f32 %v274, %v318
    %v329 = vsub.f32 %v275, %v318
    %v330 = vsub.f32 %v276, %v318
    %v331 = vsub.f32 %v277, %v318
    %v332 = vsub.f32 %v278, %v318
    %v333 = vsub.f32 %v279, %v318
    %v334 = vsub.f32 %v280, %v318
    %v335 = vmul.f32 %v319, 1.442695
    %v336 = vpow.pop %v335
    %v337 = vmul.f32 %v320, 1.442695
    %v338 = vpow.pop %v337
    %v339 = vmul.f32 %v321, 1.442695
    %v340 = vpow.pop %v339
    %v341 = vmul.f32 %v322, 1.442695
    %v342 = vpow.pop %v341
    %v343 = vmul.f32 %v323, 1.442695
    %v344 = vpow.pop %v343
    %v345 = vmul.f32 %v324, 1.442695
    %v346 = vpow.pop %v345
    %v347 = vmul.f32 %v325, 1.442695
    %v348 = vpow.pop %v347
    %v349 = vmul.f32 %v326, 1.442695
    %v350 = vpow.pop %v349
    %v351 = vmul.f32 %v327, 1.442695
    %v352 = vpow.pop %v351
    %v353 = vmul.f32 %v328, 1.442695
    %v354 = vpow.pop %v353
    %v355 = vmul.f32 %v329, 1.442695
    %v356 = vpow.pop %v355
    %v357 = vmul.f32 %v330, 1.442695
    %v358 = vpow.pop %v357
    %v359 = vmul.f32 %v331, 1.442695
    %v360 = vpow.pop %v359
    %v361 = vmul.f32 %v332, 1.442695
    %v362 = vpow.pop %v361
    %v363 = vmul.f32 %v333, 1.442695
    %v364 = vpow.pop %v363
    %v365 = vmul.f32 %v334, 1.442695
    %v366 = vpow.pop %v365
    %v367 = vadd.f32 %v336, %v338
    %v368 = vadd.f32 %v367, %v340
    %v369 = vadd.f32 %v368, %v342
    %v370 = vadd.f32 %v369, %v344
    %v371 = vadd.f32 %v370, %v346
    %v372 = vadd.f32 %v371, %v348
    %v373 = vadd.f32 %v372, %v350
    %v374 = vadd.f32 %v373, %v352
    %v375 = vadd.f32 %v374, %v354
    %v376 = vadd.f32 %v375, %v356
    %v377 = vadd.f32 %v376, %v358
    %v378 = vadd.f32 %v377, %v360
    %v379 = vadd.f32 %v378, %v362
    %v380 = vadd.f32 %v379, %v364
    %v381 = vadd.f32 %v380, %v366
    %v382 = vrot.slane %v381, 4
    %v383 = vadd.f32 %v381, %v382
    %v384 = vrot.slane %v383, 2
    %v385 = vadd.f32 %v383, %v384
    %v386 = vrot.slane %v385, 1
    %v387 = vadd.f32 %v385, %v386
    %v388 = vadd.f32 %v314, %v387
    %389 = vst [vmem:[#allocation7] sm:$0x1] %v310
    %390 = vst [vmem:[#allocation7 + $0x1] sm:$0x1] %v388
    // Predicated region
    $region22: #{local_topology_block_with_angle.2} parent=1 // pred_check
      _
    $region23: #{local_topology_block_with_angle.2} parent=1 // pred_check_branch
      %392 = sbr.rel (0) target = $region25
    $region24: #{local_topology_block_with_angle.2} parent=1 // pred_region
      %s394 = ssub.s32 32, 32
      %395 = vsyncadd [#allocation4], %s394
      %s397 = sshll.u32 [#allocation7], 4
      %s398 = int_to_ptr.vmem [resolvable:$true] %s397
      %400 = dma.vmem_to_hbm [thread:$0]  %s398, 32, %s2, [#allocation4]
    $region25: #{local_topology_block_with_angle.2} parent=1 // pred_fallthru
      _
    // Predicated region
    $region26: #{local_topology_block_with_angle.2} parent=1 // pred_check
      _
    $region27: #{local_topology_block_with_angle.2} parent=1 // pred_check_branch
      %402 = sbr.rel (0) target = $region29
    $region28: #{local_topology_block_with_angle.2} parent=1 // pred_region
      %403 = dma.done [#allocation4], 32
    $region29: #{local_topology_block_with_angle.2} parent=1 // pred_fallthru
      _
    %404 = vsyncpa [#allocation3], 1
    %405 = vsyncpa [#allocation6], 1
    %406 = vsyncpa [#allocation4], 1

</llo_original>
